<compile_context>
chip_gen: v6e
topology: v6e:2x2x1
jax: 0.10.0
libtpu: 0.0.40
codegen_flags: <defaults>
</compile_context>

<pallas_src>
import functools

import jax
import jax.numpy as jnp
from jax.experimental import pallas as pl
from jax.experimental.pallas import tpu as pltpu


_TARGET_TILE_BYTES = 4 * 1024 * 1024   # per input-tile buffer (~85% of HBM roofline)
_MIN_GRID_STEPS = 8                    # keep DMA hidden / both v7x TCs busy


def _round_up(x, m):
    return ((x + m - 1) // m) * m


def _cdiv(a, b):
    return (a + b - 1) // b


def _get_vmem_cap():
    try:
        return int(pltpu.get_tpu_info().vmem_capacity_bytes)
    except Exception:
        return 64 * 1024 * 1024        # conservative fallback (v7x physical VMEM)


def _per_row_vmem_bytes(flat_len, itemsize):
    """Approx. live VMEM bytes per row: double-buffered in+out, f32 temps, scale col."""
    row_lanes = _round_up(flat_len, 128)                  # vreg lane padding
    native = 4 * row_lanes * itemsize                     # in (x2) + out (x2)
    f32_tmp = (2 if itemsize < 4 else 1) * row_lanes * 4  # upcast / x*x intermediates
    scale_col = 2 * 128 * itemsize                        # (R,1) col pads to a vreg lane
    return native + f32_tmp + scale_col


def _pick_rows_per_tile(rows, flat_len, itemsize, vmem_cap):
    row_lanes = _round_up(flat_len, 128)
    per_row = _per_row_vmem_bytes(flat_len, itemsize)

    # largest row tile allowed by the per-buffer size target and by total VMEM
    by_tile = _TARGET_TILE_BYTES // max(1, row_lanes * itemsize)
    by_vmem = (vmem_cap // 3) // max(1, per_row)
    max_rows = max(8, (min(by_tile, by_vmem) // 8) * 8)
    # TODO(synk): for huge spatial extents (even 8 rows exceed ~VMEM/3) a 2-D grid with
    # sum/sumsq accumulators over a lane axis would be required; not implemented here.

    # keep >= ~8 grid steps when the row count allows (no forced split for tiny inputs)
    by_steps = max(8, (_cdiv(rows, _MIN_GRID_STEPS) // 8) * 8)

    return max(8, min(max_rows, by_steps))


def _vmem_limit(rows_per_tile, flat_len, itemsize, vmem_cap):
    need = _per_row_vmem_bytes(flat_len, itemsize) * rows_per_tile
    return int(min(vmem_cap, max(need * 5 // 4 + (1 << 20), 32 * 1024 * 1024)))


def _insnorm_kernel(x_ref, scale_ref, o_ref, *, eps, inv_n, low_precision_out):
    """One row tile: rows = (batch, channel) instances, lanes = spatial (H*W)."""
    x = x_ref[...]                                   # (R, L) native dtype
    xf = x.astype(jnp.float32)

    # single pass: two lane reductions (XLU), everything else is column-width work
    s1 = jnp.sum(xf, axis=-1, keepdims=True)         # (R, 1)
    s2 = jnp.sum(xf * xf, axis=-1, keepdims=True)    # (R, 1)
    mean = s1 * inv_n
    var = jnp.maximum(s2 * inv_n - mean * mean, 0.0)  # guard tiny negative round-off

    s = scale_ref[...].astype(jnp.float32)            # (R, 1)
    a = jax.lax.rsqrt(var + eps) * s                  # (R, 1)
    b = s - mean * a                                  # NOTE: module reuses scale as shift

    if low_precision_out:
        # v6e/v7x bf16 VALU: keep the hot full-tile multiply-add in the input dtype
        o_ref[...] = (x * a.astype(x.dtype) + b.astype(x.dtype)).astype(o_ref.dtype)
    else:
        o_ref[...] = (xf * a + b).astype(o_ref.dtype)


def insnorm_pallas(x, scale, eps=1e-9, rows_per_tile=None):
    """x: (N, C, H, W), scale: (C,). Returns (x - mean)/sqrt(var_pop + eps) * scale + scale."""
    N, C, H, W = x.shape
    flat_len = H * W
    rows = N * C
    itemsize = jnp.dtype(x.dtype).itemsize
    vmem_cap = _get_vmem_cap()

    if rows_per_tile is None:
        rows_per_tile = _pick_rows_per_tile(rows, flat_len, itemsize, vmem_cap)
    else:
        rows_per_tile = _round_up(max(int(rows_per_tile), 8), 8)

    # never tile larger than the array; a full-dim row block is always legal
    if rows_per_tile >= rows:
        rows_per_tile = rows
    vmem_limit = _vmem_limit(rows_per_tile, flat_len, itemsize, vmem_cap)

    grid = (_cdiv(rows, rows_per_tile),)

    # no host-side padding: lane block = full flat_len (masked tail stores if needed),
    # row tail handled by Pallas' partial last block.
    x2d = x.reshape(rows, flat_len)
    scale_rows = jnp.tile(scale.astype(x.dtype), (N,)).reshape(rows, 1)

    kernel = functools.partial(
        _insnorm_kernel,
        eps=float(eps),
        inv_n=1.0 / float(flat_len),
        low_precision_out=(itemsize < 4),
    )

    out2d = pl.pallas_call(
        kernel,
        out_shape=jax.ShapeDtypeStruct((rows, flat_len), x.dtype),
        grid_spec=pltpu.PrefetchScalarGridSpec(
            num_scalar_prefetch=0,
            grid=grid,
            in_specs=[
                pl.BlockSpec((rows_per_tile, flat_len), lambda i: (i, 0)),
                pl.BlockSpec((rows_per_tile, 1), lambda i: (i, 0)),
            ],
            out_specs=pl.BlockSpec((rows_per_tile, flat_len), lambda i: (i, 0)),
        ),
        compiler_params=pltpu.CompilerParams(
            dimension_semantics=("parallel",),
            vmem_limit_bytes=vmem_limit,
        ),
    )(x2d, scale_rows)

    return out2d.reshape(N, C, H, W)


def insnorm_ref(x, scale, eps=1e-9):
    """Pure-JAX reference matching the PyTorch forward exactly."""
    N, C, H, W = x.shape
    n = H * W
    vec = x.reshape(N, C, n)
    mean = jnp.mean(vec, axis=2)[:, :, None, None]
    var_unbiased = jnp.var(vec, axis=2, ddof=1)[:, :, None, None]
    var = var_unbiased * ((n - 1) / float(n))
    s = scale[None, :, None, None]
    out = (x - mean) / jnp.sqrt(var + eps)
    return out * s + s  # module uses scale as the shift as well


if __name__ == "__main__":
    key = jax.random.PRNGKey(0)
    kx, ks, kx2, ks2 = jax.random.split(key, 4)

    # primary small shape implied by the NCHW forward
    N, C, H, W = 2, 4, 16, 16
    x = jax.random.normal(kx, (N, C, H, W), dtype=jnp.float32)
    scale = jax.random.uniform(ks, (C,), dtype=jnp.float32)  # torch .uniform_()

    out = jax.block_until_ready(insnorm_pallas(x, scale))
    ref = insnorm_ref(x, scale)
    assert out.shape == (N, C, H, W)
    assert jnp.allclose(out, ref, atol=1e-4, rtol=1e-4), "mismatch (aligned shape)"

    # misaligned path: odd spatial extent (lane dim not a multiple of 128) and a row
    # count that does not divide the row tile (exercises the partial last block)
    N2, C2, H2, W2 = 3, 5, 7, 7
    x2 = jax.random.normal(kx2, (N2, C2, H2, W2), dtype=jnp.float32)
    scale2 = jax.random.uniform(ks2, (C2,), dtype=jnp.float32)
    out2 = jax.block_until_ready(insnorm_pallas(x2, scale2))
    ref2 = insnorm_ref(x2, scale2)
    assert jnp.allclose(out2, ref2, atol=1e-4, rtol=1e-4), "mismatch (misaligned shape)"

    print("KERNEL_OK")
</pallas_src>

<mosaic_0001>
module attributes {stable_mosaic.version = 11 : i64} {
  func.func @_insnorm_kernel(%arg0: i32, %arg1: memref<8x256xf32, #tpu.memory_space<vmem>>, %arg2: memref<8x1xf32, #tpu.memory_space<vmem>>, %arg3: memref<8x256xf32, #tpu.memory_space<vmem>>) attributes {dimension_semantics = [#tpu.dimension_semantics<parallel>], iteration_bounds = array<i64: 1>, scalar_prefetch = 0 : i64, scratch_operands = 0 : i64, tpu.core_type = #tpu.core_type<tc>, window_params = [{transform_indices = @transform_0, window_bounds = array<i64: 8, 256>}, {transform_indices = @transform_1, window_bounds = array<i64: 8, 1>}, {transform_indices = @transform_2, window_bounds = array<i64: 8, 256>}]} {
    %c0 = arith.constant 0 : index
    %c0_0 = arith.constant 0 : index
    %0 = vector.load %arg1[%c0, %c0_0] : memref<8x256xf32, #tpu.memory_space<vmem>>, vector<8x256xf32>
    %cst = arith.constant dense<0.000000e+00> : vector<8xf32>
    %1 = vector.multi_reduction <add>, %0, %cst [1] : vector<8x256xf32> to vector<8xf32>
    %2 = vector.shape_cast %1 : vector<8xf32> to vector<8x1xf32>
    %3 = arith.mulf %0, %0 : vector<8x256xf32>
    %cst_1 = arith.constant dense<0.000000e+00> : vector<8xf32>
    %4 = vector.multi_reduction <add>, %3, %cst_1 [1] : vector<8x256xf32> to vector<8xf32>
    %5 = vector.shape_cast %4 : vector<8xf32> to vector<8x1xf32>
    %cst_2 = arith.constant 3.906250e-03 : f32
    %6 = vector.broadcast %cst_2 : f32 to vector<8x1xf32>
    %7 = arith.mulf %2, %6 : vector<8x1xf32>
    %cst_3 = arith.constant 3.906250e-03 : f32
    %8 = vector.broadcast %cst_3 : f32 to vector<8x1xf32>
    %9 = arith.mulf %5, %8 : vector<8x1xf32>
    %10 = arith.mulf %7, %7 : vector<8x1xf32>
    %11 = arith.subf %9, %10 : vector<8x1xf32>
    %cst_4 = arith.constant 0.000000e+00 : f32
    %12 = vector.broadcast %cst_4 : f32 to vector<8x1xf32>
    %13 = arith.maximumf %11, %12 : vector<8x1xf32>
    %c0_5 = arith.constant 0 : index
    %c0_6 = arith.constant 0 : index
    %14 = vector.load %arg2[%c0_5, %c0_6] : memref<8x1xf32, #tpu.memory_space<vmem>>, vector<8x1xf32>
    %cst_7 = arith.constant 9.99999971E-10 : f32
    %15 = vector.broadcast %cst_7 : f32 to vector<8x1xf32>
    %16 = arith.addf %13, %15 : vector<8x1xf32>
    %17 = math.rsqrt %16 : vector<8x1xf32>
    %18 = arith.mulf %17, %14 : vector<8x1xf32>
    %19 = arith.mulf %7, %18 : vector<8x1xf32>
    %20 = arith.subf %14, %19 : vector<8x1xf32>
    %21 = vector.broadcast %18 : vector<8x1xf32> to vector<8x256xf32>
    %22 = arith.mulf %0, %21 : vector<8x256xf32>
    %23 = vector.broadcast %20 : vector<8x1xf32> to vector<8x256xf32>
    %24 = arith.addf %22, %23 : vector<8x256xf32>
    %c0_8 = arith.constant 0 : index
    %c0_9 = arith.constant 0 : index
    %25 = vector.load %arg3[%c0_8, %c0_9] : memref<8x256xf32, #tpu.memory_space<vmem>>, vector<8x256xf32>
    tpu.vector_store %arg3[%c0_8, %c0_9], %24 {strides = array<i32>} : memref<8x256xf32, #tpu.memory_space<vmem>>, vector<8x256xf32>,
    return
  }
  func.func @transform_0(%arg0: i32) -> (i32, i32) {
    %c0_i32 = arith.constant 0 : i32
    %c0_i32_0 = arith.constant 0 : i32
    return %arg0, %c0_i32 : i32, i32
  }
  func.func @transform_1(%arg0: i32) -> (i32, i32) {
    %c0_i32 = arith.constant 0 : i32
    %c0_i32_0 = arith.constant 0 : i32
    return %arg0, %c0_i32 : i32, i32
  }
  func.func @transform_2(%arg0: i32) -> (i32, i32) {
    %c0_i32 = arith.constant 0 : i32
    %c0_i32_0 = arith.constant 0 : i32
    return %arg0, %c0_i32 : i32, i32
  }
}

</mosaic_0001>

<llo_original>
// kernel: tpu_custom_call.1
$region0: #{tpu_custom_call.1}
  #allocation0 [shape = 'u32[]', space=smem, size = 0x4, offset = 0x4, fixed_abs, tag = 'smem constant byte address 0x4 - core index']
  #allocation1 [shape = 'u32[144,128]{1,0:T(1,128)}', space=vmem, size = 0x12000, scoped, tag = 'internal scratch']
  %s0 = inlined_call_operand.hbm [shape: f32[8,256], index: 0, kind: input, shape index: {}]
  %s1 = inlined_call_operand.vmem [shape: f32[8,1], index: 1, kind: input, shape index: {}]
  %s2 = inlined_call_operand.hbm [shape: f32[8,256], index: 2, kind: output, shape index: {}]
  %s3 = sld [smem:[#allocation0]]
  $region22: #{tpu_custom_call.1} parent=0
    _
  %s5 = ssub.s32 1, %s3
  %s6 = scalar_select 0, %s5, %s3
  $region1: #{tpu_custom_call.1} parent=0
    #allocation2 [shape = 'u8[8192]{0}', space=vmem, size = 0x2000, scoped, tag = 'input window, operand 0, single buffered']
    #allocation3 [shape = 's32[1]{0}', space=sflag, size = 0x4, scoped, tag = 'scoped memory for tpu_custom_call.1']
    #allocation4 [shape = 's32[1]{0}', space=sflag, size = 0x4, scoped, tag = 'scoped memory for tpu_custom_call.1']
    #allocation5 [shape = 'u8[8192]{0}', space=vmem, size = 0x2000, scoped, tag = 'output window, operand 0, single buffered']
    %7 = vsyncpa [#allocation3], 0
    %8 = vsyncpa [#allocation4], 0
    // Predicated region
    $region2: #{tpu_custom_call.1} parent=1 // pred_check
      _
    $region3: #{tpu_custom_call.1} parent=1 // pred_check_branch
      %10 = sbr.rel (0) target = $region5
    $region4: #{tpu_custom_call.1} parent=1 // pred_region
      %s12 = ssub.s32 256, 256
      %13 = vsyncadd [#allocation3], %s12
      %s15 = sshll.u32 [#allocation2], 4
      %s16 = int_to_ptr.vmem [resolvable:$true] %s15
      %18 = dma.hbm_to_vmem [thread:$0]  %s0, 256, %s16, [#allocation3]
    $region5: #{tpu_custom_call.1} parent=1 // pred_fallthru
      _
    // Predicated region
    $region6: #{tpu_custom_call.1} parent=1 // pred_check
      _
    $region7: #{tpu_custom_call.1} parent=1 // pred_check_branch
      %20 = sbr.rel (0) target = $region9
    $region8: #{tpu_custom_call.1} parent=1 // pred_region
      _
    $region9: #{tpu_custom_call.1} parent=1 // pred_fallthru
      _
    // Predicated region
    $region10: #{tpu_custom_call.1} parent=1 // pred_check
      _
    $region11: #{tpu_custom_call.1} parent=1 // pred_check_branch
      %22 = sbr.rel (0) target = $region13
    $region12: #{tpu_custom_call.1} parent=1 // pred_region
      %23 = dma.done [#allocation3], 256
    $region13: #{tpu_custom_call.1} parent=1 // pred_fallthru
      _
    %v24 = vld [vmem:[#allocation2] sm:$0xff]
    %v25 = vld [vmem:[#allocation2 + $0x8] sm:$0xff]
    %v26 = vadd.f32 %v24, %v25
    %27 = vadd.xlane.f32.xlu0 %v26
    %v28 = vpop.xlane.xlu0 %27
    %v29 = vmul.f32 %v24, %v24
    %v30 = vmul.f32 %v25, %v25
    %v31 = vadd.f32 %v29, %v30
    %32 = vadd.xlane.f32.xlu0 %v31
    %v33 = vpop.xlane.xlu0 %32
    %v34 = vmul.f32 %v28, 0.00390625
    %v35 = vmul.f32 %v33, 0.00390625
    %v36 = vmul.f32 %v34, %v34
    %v37 = vsub.f32 %v35, %v36
    %v38 = vmax.f32 %v37, 0.0
    %v39 = vld [vmem:[%s1] sm:$0xff]
    %v40 = vadd.f32 %v38, 1e-09
    %v41 = vrsqrt.pop %v40
    %v42 = vmul.f32 %v41, %v39
    %v43 = vmul.f32 %v34, %v42
    %v44 = vsub.f32 %v39, %v43
    %46 = vset.pattern.permute.xlu0 0
    %47 = vperm.xlu0 %46, %v42
    %v48 = vpop.permute.xlu0 %47
    %v50 = vmul.f32 %v24, %v48
    %v51 = vmul.f32 %v25, %v48
    %53 = vset.pattern.permute.xlu0 0
    %54 = vperm.xlu0 %53, %v44
    %v55 = vpop.permute.xlu0 %54
    %v57 = vadd.f32 %v50, %v55
    %v58 = vadd.f32 %v51, %v55
    %59 = vst [vmem:[#allocation5] sm:$0xff] %v57
    %60 = vst [vmem:[#allocation5 + $0x8] sm:$0xff] %v58
    // Predicated region
    $region14: #{tpu_custom_call.1} parent=1 // pred_check
      _
    $region15: #{tpu_custom_call.1} parent=1 // pred_check_branch
      %62 = sbr.rel (0) target = $region17
    $region16: #{tpu_custom_call.1} parent=1 // pred_region
      %s64 = ssub.s32 256, 256
      %65 = vsyncadd [#allocation4], %s64
      %s67 = sshll.u32 [#allocation5], 4
      %s68 = int_to_ptr.vmem [resolvable:$true] %s67
      %70 = dma.vmem_to_hbm [thread:$0]  %s68, 256, %s2, [#allocation4]
    $region17: #{tpu_custom_call.1} parent=1 // pred_fallthru
      _
    // Predicated region
    $region18: #{tpu_custom_call.1} parent=1 // pred_check
      _
    $region19: #{tpu_custom_call.1} parent=1 // pred_check_branch
      %72 = sbr.rel (0) target = $region21
    $region20: #{tpu_custom_call.1} parent=1 // pred_region
      %73 = dma.done [#allocation4], 256
    $region21: #{tpu_custom_call.1} parent=1 // pred_fallthru
      _
    %74 = vsyncpa [#allocation3], 1
    %75 = vsyncpa [#allocation4], 1

</llo_original>
